<compile_context>
chip_gen: v7x
topology: tpu7x:2x2x1
jax: 0.10.0
libtpu: 0.0.40
codegen_flags: <defaults>
</compile_context>

<pallas_src>
import functools
import math

import jax
import jax.numpy as jnp
from jax import lax
from jax.experimental import pallas as pl
from jax.experimental.pallas import tpu as pltpu


def _mha_kernel(q_ref, k_ref, v_ref, wq_ref, wk_ref, wv_ref, o_ref,
                *, num_heads, head_dim_k, head_dim_v):
    # Blocks: q -> (1, TQ, E); k/v -> (1, S, E); wq/wk -> (E, kdim);
    #         wv -> (E, vdim); out -> (1, TQ, H*Dv)
    out_dtype = o_ref.dtype
    mm_dtype = jnp.bfloat16          # MXU operand dtype for the attention matmuls

    x_q = q_ref[0]                   # (TQ, E)
    x_k = k_ref[0]                   # (S, E)
    x_v = v_ref[0]                   # (S, E)

    # Wide projections over all heads (full-width MXU matmuls, f32 accumulate).
    # The 1/sqrt(Dh) softmax scale is already folded into Wq by the wrapper.
    q_all = jnp.dot(x_q, wq_ref[...],
                    preferred_element_type=jnp.float32).astype(mm_dtype)       # (TQ, kdim)
    # K is produced directly transposed, (kdim, S) = (x_k @ Wk)^T, so per-head
    # slices are sublane slices and the logits matmul needs no transpose.
    k_all_t = lax.dot_general(wk_ref[...], x_k, (((0,), (1,)), ((), ())),
                              preferred_element_type=jnp.float32).astype(mm_dtype)  # (kdim, S)
    # Values cast to the MXU operand dtype once, outside the head loop.
    v_all = jnp.dot(x_v, wv_ref[...],
                    preferred_element_type=jnp.float32).astype(mm_dtype)       # (S, vdim)

    for h in range(num_heads):       # small H -> unrolled at trace time
        q_h = lax.slice_in_dim(q_all, h * head_dim_k, (h + 1) * head_dim_k, axis=1)      # (TQ, Dh)
        k_h_t = lax.slice_in_dim(k_all_t, h * head_dim_k, (h + 1) * head_dim_k, axis=0)  # (Dh, S)
        v_h = lax.slice_in_dim(v_all, h * head_dim_v, (h + 1) * head_dim_v, axis=1)      # (S, Dv)

        # bf16 operands, f32 accumulation on the MXU.
        logits = jnp.dot(q_h, k_h_t, preferred_element_type=jnp.float32)       # (TQ, S) f32

        # Numerically stable softmax in f32; the reciprocal goes to the EUP slot.
        m = jnp.max(logits, axis=-1, keepdims=True)
        e = jnp.exp(logits - m)
        denom = jnp.sum(e, axis=-1, keepdims=True)
        attn = (e * pl.reciprocal(denom, approx=True)).astype(mm_dtype)        # (TQ, S)

        out_h = jnp.dot(attn, v_h, preferred_element_type=jnp.float32)         # (TQ, Dv) f32

        # Direct per-head store into the lane-dense output block (no concat);
        # the HBM writeback of the full (1, TQ, H*Dv) block stays dense.
        o_ref[0, :, h * head_dim_v:(h + 1) * head_dim_v] = out_h.astype(out_dtype)


def _pick_query_tile(S):
    # Largest MXU-friendly tile that divides S; otherwise take the full sequence.
    for cand in (512, 256, 128):
        if S % cand == 0:
            return cand
    return S


def mha_forward(query, key, value, wq, wk, wv, num_heads):
    """query/key/value: (B, S, E); wq/wk: (E, kdim); wv: (E, vdim). Returns (B, S, vdim)."""
    B, S, E = query.shape
    kdim = wq.shape[1]
    vdim = wv.shape[1]
    H = num_heads
    assert kdim % H == 0 and vdim % H == 0, "kdim/vdim must be divisible by num_heads"
    Dh = kdim // H
    Dv = vdim // H

    # Fold the softmax 1/sqrt(Dh) scale into Wq (constant weight, scaled once).
    wq = (wq * (1.0 / math.sqrt(Dh))).astype(wq.dtype)

    TQ = _pick_query_tile(S)
    grid = (B, S // TQ)

    itemsize = jnp.dtype(query.dtype).itemsize
    cost = pl.CostEstimate(
        flops=2 * B * S * E * (2 * kdim + vdim) + 2 * B * H * S * S * (Dh + Dv),
        transcendentals=B * H * S * S,
        bytes_accessed=itemsize * (3 * B * S * E + E * (2 * kdim + vdim) + B * S * vdim),
    )

    # Explicit VMEM budget: pipeline double-buffers the I/O blocks; add in-kernel
    # temporaries; 2x headroom; capped at 52 MiB so it is valid on v7x (64 MiB
    # physical) as well as v5e/v6e (128 MiB).
    io_bytes = 2 * itemsize * (TQ * E + 2 * S * E + TQ * vdim)       # q/k/v/out blocks
    io_bytes += 2 * itemsize * (2 * E * kdim + E * vdim)             # weights (const block index)
    tmp_bytes = 6 * (TQ * kdim + kdim * S + S * vdim)                # f32 + bf16 projections
    tmp_bytes += 4 * (3 * TQ * S + TQ * Dv) + 2 * TQ * S             # logits/e/attn/out per head
    vmem_limit = int(min(52 << 20, max(32 << 20, 2 * (io_bytes + tmp_bytes))))

    kernel = functools.partial(_mha_kernel, num_heads=H,
                               head_dim_k=Dh, head_dim_v=Dv)

    return pl.pallas_call(
        kernel,
        out_shape=jax.ShapeDtypeStruct((B, S, vdim), query.dtype),
        grid_spec=pltpu.PrefetchScalarGridSpec(
            num_scalar_prefetch=0,
            grid=grid,
            in_specs=[
                pl.BlockSpec((1, TQ, E), lambda b, t: (b, t, 0)),    # query tile
                pl.BlockSpec((1, S, E), lambda b, t: (b, 0, 0)),     # key   (full S, const in t)
                pl.BlockSpec((1, S, E), lambda b, t: (b, 0, 0)),     # value (full S, const in t)
                pl.BlockSpec((E, kdim), lambda b, t: (0, 0)),        # Wq (pre-scaled, all heads)
                pl.BlockSpec((E, kdim), lambda b, t: (0, 0)),        # Wk
                pl.BlockSpec((E, vdim), lambda b, t: (0, 0)),        # Wv
            ],
            out_specs=pl.BlockSpec((1, TQ, vdim), lambda b, t: (b, t, 0)),
        ),
        compiler_params=pltpu.CompilerParams(
            dimension_semantics=("parallel", "parallel"),
            vmem_limit_bytes=vmem_limit),
        cost_estimate=cost,
    )(query, key, value, wq, wk, wv)


def _xavier_uniform(key, fan_out, fan_in, dtype=jnp.float32):
    # Matches nn.init.xavier_uniform_ bounds for a (fan_out, fan_in) Linear weight.
    bound = math.sqrt(6.0 / (fan_in + fan_out))
    return jax.random.uniform(key, (fan_out, fan_in), dtype=dtype,
                              minval=-bound, maxval=bound)


def _reference(query, key, value, wq, wk, wv, num_heads):
    B, S, E = query.shape
    H = num_heads
    kdim, vdim = wq.shape[1], wv.shape[1]
    Dh, Dv = kdim // H, vdim // H
    q = (query @ wq).reshape(B, S, H, Dh).transpose(0, 2, 1, 3)
    k = (key @ wk).reshape(B, S, H, Dh).transpose(0, 2, 1, 3)
    v = (value @ wv).reshape(B, S, H, Dv).transpose(0, 2, 1, 3)
    logits = jnp.einsum("bhqd,bhkd->bhqk", q, k) / math.sqrt(Dh)
    attn = jax.nn.softmax(logits, axis=-1)
    out = jnp.einsum("bhqk,bhkd->bhqd", attn, v)
    return out.transpose(0, 2, 1, 3).reshape(B, S, H * Dv)


if __name__ == "__main__":
    B, S, E = 2, 8, 32
    num_heads = 4
    kdim = vdim = E  # module defaults (kdim=vdim=embed_dim)

    root = jax.random.PRNGKey(0)
    k_q, k_k, k_v, k_wq, k_wk, k_wv = jax.random.split(root, 6)

    query = jax.random.normal(k_q, (B, S, E), dtype=jnp.float32)
    key = jax.random.normal(k_k, (B, S, E), dtype=jnp.float32)
    value = jax.random.normal(k_v, (B, S, E), dtype=jnp.float32)

    # nn.Linear weight is (out, in); projection computes x @ W.T -> store transposed.
    wq = _xavier_uniform(k_wq, kdim, E).T   # (E, kdim)
    wk = _xavier_uniform(k_wk, kdim, E).T   # (E, kdim)
    wv = _xavier_uniform(k_wv, vdim, E).T   # (E, vdim)

    out = mha_forward(query, key, value, wq, wk, wv, num_heads)
    jax.block_until_ready(out)

    ref = _reference(query, key, value, wq, wk, wv, num_heads)
    assert out.shape == (B, S, vdim)
    # Tolerance accounts for bf16 MXU operands on the attention matmuls and the
    # approximate (EUP) reciprocal in the softmax denominator (f32 accumulation).
    assert jnp.allclose(out, ref, atol=5e-2, rtol=5e-2), float(
        jnp.max(jnp.abs(out - ref)))

    print("KERNEL_OK")
</pallas_src>

<mosaic_0001>
module attributes {stable_mosaic.version = 11 : i64} {
  func.func @_mha_kernel(%arg0: i32, %arg1: i32, %arg2: memref<1x8x32xf32, #tpu.memory_space<vmem>>, %arg3: memref<1x8x32xf32, #tpu.memory_space<vmem>>, %arg4: memref<1x8x32xf32, #tpu.memory_space<vmem>>, %arg5: memref<32x32xf32, #tpu.memory_space<vmem>>, %arg6: memref<32x32xf32, #tpu.memory_space<vmem>>, %arg7: memref<32x32xf32, #tpu.memory_space<vmem>>, %arg8: memref<1x8x32xf32, #tpu.memory_space<vmem>>) attributes {dimension_semantics = [#tpu.dimension_semantics<parallel>, #tpu.dimension_semantics<parallel>], iteration_bounds = array<i64: 2, 1>, scalar_prefetch = 0 : i64, scratch_operands = 0 : i64, tpu.core_type = #tpu.core_type<tc>, window_params = [{transform_indices = @transform_0, window_bounds = array<i64: 1, 8, 32>}, {transform_indices = @transform_1, window_bounds = array<i64: 1, 8, 32>}, {transform_indices = @transform_2, window_bounds = array<i64: 1, 8, 32>}, {pipeline_mode = #tpu.pipeline_mode<synchronous>, transform_indices = @transform_3, window_bounds = array<i64: 32, 32>}, {pipeline_mode = #tpu.pipeline_mode<synchronous>, transform_indices = @transform_4, window_bounds = array<i64: 32, 32>}, {pipeline_mode = #tpu.pipeline_mode<synchronous>, transform_indices = @transform_5, window_bounds = array<i64: 32, 32>}, {transform_indices = @transform_6, window_bounds = array<i64: 1, 8, 32>}]} {
    %c0 = arith.constant 0 : index
    %c0_0 = arith.constant 0 : index
    %c0_1 = arith.constant 0 : index
    %0 = vector.load %arg2[%c0, %c0_0, %c0_1] : memref<1x8x32xf32, #tpu.memory_space<vmem>>, vector<1x8x32xf32>
    %1 = vector.shape_cast %0 : vector<1x8x32xf32> to vector<8x32xf32>
    %c0_2 = arith.constant 0 : index
    %c0_3 = arith.constant 0 : index
    %c0_4 = arith.constant 0 : index
    %2 = vector.load %arg3[%c0_2, %c0_3, %c0_4] : memref<1x8x32xf32, #tpu.memory_space<vmem>>, vector<1x8x32xf32>
    %3 = vector.shape_cast %2 : vector<1x8x32xf32> to vector<8x32xf32>
    %c0_5 = arith.constant 0 : index
    %c0_6 = arith.constant 0 : index
    %c0_7 = arith.constant 0 : index
    %4 = vector.load %arg4[%c0_5, %c0_6, %c0_7] : memref<1x8x32xf32, #tpu.memory_space<vmem>>, vector<1x8x32xf32>
    %5 = vector.shape_cast %4 : vector<1x8x32xf32> to vector<8x32xf32>
    %c0_8 = arith.constant 0 : index
    %c0_9 = arith.constant 0 : index
    %6 = vector.load %arg5[%c0_8, %c0_9] : memref<32x32xf32, #tpu.memory_space<vmem>>, vector<32x32xf32>
    %cst = arith.constant dense<0.000000e+00> : vector<8x32xf32>
    %7 = tpu.matmul %1, %6, %cst {dimension_numbers = #tpu.dot_dimension_numbers<[1], [0], [0], [1], [0, 0, 1, 1], [], []>} : vector<8x32xf32>, vector<32x32xf32>, vector<8x32xf32> -> vector<8x32xf32>
    %8 = arith.truncf %7 : vector<8x32xf32> to vector<8x32xbf16>
    %c0_10 = arith.constant 0 : index
    %c0_11 = arith.constant 0 : index
    %9 = vector.load %arg6[%c0_10, %c0_11] : memref<32x32xf32, #tpu.memory_space<vmem>>, vector<32x32xf32>
    %cst_12 = arith.constant dense<0.000000e+00> : vector<32x8xf32>
    %10 = tpu.matmul %9, %3, %cst_12 {dimension_numbers = #tpu.dot_dimension_numbers<[0], [1], [1], [0], [0, 1, 1, 0], [], []>} : vector<32x32xf32>, vector<8x32xf32>, vector<32x8xf32> -> vector<32x8xf32>
    %11 = arith.truncf %10 : vector<32x8xf32> to vector<32x8xbf16>
    %c0_13 = arith.constant 0 : index
    %c0_14 = arith.constant 0 : index
    %12 = vector.load %arg7[%c0_13, %c0_14] : memref<32x32xf32, #tpu.memory_space<vmem>>, vector<32x32xf32>
    %cst_15 = arith.constant dense<0.000000e+00> : vector<8x32xf32>
    %13 = tpu.matmul %5, %12, %cst_15 {dimension_numbers = #tpu.dot_dimension_numbers<[1], [0], [0], [1], [0, 0, 1, 1], [], []>} : vector<8x32xf32>, vector<32x32xf32>, vector<8x32xf32> -> vector<8x32xf32>
    %14 = arith.truncf %13 : vector<8x32xf32> to vector<8x32xbf16>
    %15 = vector.extract_strided_slice %8 {offsets = [0, 0], sizes = [8, 8], strides = [1, 1]} : vector<8x32xbf16> to vector<8x8xbf16>
    %16 = vector.extract_strided_slice %11 {offsets = [0, 0], sizes = [8, 8], strides = [1, 1]} : vector<32x8xbf16> to vector<8x8xbf16>
    %17 = vector.extract_strided_slice %14 {offsets = [0, 0], sizes = [8, 8], strides = [1, 1]} : vector<8x32xbf16> to vector<8x8xbf16>
    %cst_16 = arith.constant dense<0.000000e+00> : vector<8x8xf32>
    %18 = tpu.matmul %15, %16, %cst_16 {dimension_numbers = #tpu.dot_dimension_numbers<[1], [0], [0], [1], [0, 0, 1, 1], [], []>} : vector<8x8xbf16>, vector<8x8xbf16>, vector<8x8xf32> -> vector<8x8xf32>
    %cst_17 = arith.constant dense<0xFF800000> : vector<8xf32>
    %19 = vector.multi_reduction <maximumf>, %18, %cst_17 [1] : vector<8x8xf32> to vector<8xf32>
    %20 = vector.shape_cast %19 : vector<8xf32> to vector<8x1xf32>
    %21 = vector.broadcast %20 : vector<8x1xf32> to vector<8x8xf32>
    %22 = arith.subf %18, %21 : vector<8x8xf32>
    %23 = math.exp %22 : vector<8x8xf32>
    %cst_18 = arith.constant dense<0.000000e+00> : vector<8xf32>
    %24 = vector.multi_reduction <add>, %23, %cst_18 [1] : vector<8x8xf32> to vector<8xf32>
    %25 = vector.shape_cast %24 : vector<8xf32> to vector<8x1xf32>
    %26 = tpu.reciprocal %25 {approx = true} : vector<8x1xf32> -> vector<8x1xf32>
    %27 = vector.broadcast %26 : vector<8x1xf32> to vector<8x8xf32>
    %28 = arith.mulf %23, %27 : vector<8x8xf32>
    %29 = arith.truncf %28 : vector<8x8xf32> to vector<8x8xbf16>
    %cst_19 = arith.constant dense<0.000000e+00> : vector<8x8xf32>
    %30 = tpu.matmul %29, %17, %cst_19 {dimension_numbers = #tpu.dot_dimension_numbers<[1], [0], [0], [1], [0, 0, 1, 1], [], []>} : vector<8x8xbf16>, vector<8x8xbf16>, vector<8x8xf32> -> vector<8x8xf32>
    %c0_20 = arith.constant 0 : index
    %c0_21 = arith.constant 0 : index
    %c0_22 = arith.constant 0 : index
    %31 = vector.load %arg8[%c0_20, %c0_21, %c0_22] : memref<1x8x32xf32, #tpu.memory_space<vmem>>, vector<1x8x8xf32>
    %32 = vector.shape_cast %31 : vector<1x8x8xf32> to vector<8x8xf32>
    %33 = vector.shape_cast %30 : vector<8x8xf32> to vector<1x8x8xf32>
    tpu.vector_store %arg8[%c0_20, %c0_21, %c0_22], %33 {strides = array<i32>} : memref<1x8x32xf32, #tpu.memory_space<vmem>>, vector<1x8x8xf32>,
    %34 = vector.extract_strided_slice %8 {offsets = [0, 8], sizes = [8, 8], strides = [1, 1]} : vector<8x32xbf16> to vector<8x8xbf16>
    %35 = vector.extract_strided_slice %11 {offsets = [8, 0], sizes = [8, 8], strides = [1, 1]} : vector<32x8xbf16> to vector<8x8xbf16>
    %36 = vector.extract_strided_slice %14 {offsets = [0, 8], sizes = [8, 8], strides = [1, 1]} : vector<8x32xbf16> to vector<8x8xbf16>
    %cst_23 = arith.constant dense<0.000000e+00> : vector<8x8xf32>
    %37 = tpu.matmul %34, %35, %cst_23 {dimension_numbers = #tpu.dot_dimension_numbers<[1], [0], [0], [1], [0, 0, 1, 1], [], []>} : vector<8x8xbf16>, vector<8x8xbf16>, vector<8x8xf32> -> vector<8x8xf32>
    %cst_24 = arith.constant dense<0xFF800000> : vector<8xf32>
    %38 = vector.multi_reduction <maximumf>, %37, %cst_24 [1] : vector<8x8xf32> to vector<8xf32>
    %39 = vector.shape_cast %38 : vector<8xf32> to vector<8x1xf32>
    %40 = vector.broadcast %39 : vector<8x1xf32> to vector<8x8xf32>
    %41 = arith.subf %37, %40 : vector<8x8xf32>
    %42 = math.exp %41 : vector<8x8xf32>
    %cst_25 = arith.constant dense<0.000000e+00> : vector<8xf32>
    %43 = vector.multi_reduction <add>, %42, %cst_25 [1] : vector<8x8xf32> to vector<8xf32>
    %44 = vector.shape_cast %43 : vector<8xf32> to vector<8x1xf32>
    %45 = tpu.reciprocal %44 {approx = true} : vector<8x1xf32> -> vector<8x1xf32>
    %46 = vector.broadcast %45 : vector<8x1xf32> to vector<8x8xf32>
    %47 = arith.mulf %42, %46 : vector<8x8xf32>
    %48 = arith.truncf %47 : vector<8x8xf32> to vector<8x8xbf16>
    %cst_26 = arith.constant dense<0.000000e+00> : vector<8x8xf32>
    %49 = tpu.matmul %48, %36, %cst_26 {dimension_numbers = #tpu.dot_dimension_numbers<[1], [0], [0], [1], [0, 0, 1, 1], [], []>} : vector<8x8xbf16>, vector<8x8xbf16>, vector<8x8xf32> -> vector<8x8xf32>
    %c0_27 = arith.constant 0 : index
    %c0_28 = arith.constant 0 : index
    %c8 = arith.constant 8 : index
    %50 = vector.load %arg8[%c0_27, %c0_28, %c8] : memref<1x8x32xf32, #tpu.memory_space<vmem>>, vector<1x8x8xf32>
    %51 = vector.shape_cast %50 : vector<1x8x8xf32> to vector<8x8xf32>
    %52 = vector.shape_cast %49 : vector<8x8xf32> to vector<1x8x8xf32>
    tpu.vector_store %arg8[%c0_27, %c0_28, %c8], %52 {strides = array<i32>} : memref<1x8x32xf32, #tpu.memory_space<vmem>>, vector<1x8x8xf32>,
    %53 = vector.extract_strided_slice %8 {offsets = [0, 16], sizes = [8, 8], strides = [1, 1]} : vector<8x32xbf16> to vector<8x8xbf16>
    %54 = vector.extract_strided_slice %11 {offsets = [16, 0], sizes = [8, 8], strides = [1, 1]} : vector<32x8xbf16> to vector<8x8xbf16>
    %55 = vector.extract_strided_slice %14 {offsets = [0, 16], sizes = [8, 8], strides = [1, 1]} : vector<8x32xbf16> to vector<8x8xbf16>
    %cst_29 = arith.constant dense<0.000000e+00> : vector<8x8xf32>
    %56 = tpu.matmul %53, %54, %cst_29 {dimension_numbers = #tpu.dot_dimension_numbers<[1], [0], [0], [1], [0, 0, 1, 1], [], []>} : vector<8x8xbf16>, vector<8x8xbf16>, vector<8x8xf32> -> vector<8x8xf32>
    %cst_30 = arith.constant dense<0xFF800000> : vector<8xf32>
    %57 = vector.multi_reduction <maximumf>, %56, %cst_30 [1] : vector<8x8xf32> to vector<8xf32>
    %58 = vector.shape_cast %57 : vector<8xf32> to vector<8x1xf32>
    %59 = vector.broadcast %58 : vector<8x1xf32> to vector<8x8xf32>
    %60 = arith.subf %56, %59 : vector<8x8xf32>
    %61 = math.exp %60 : vector<8x8xf32>
    %cst_31 = arith.constant dense<0.000000e+00> : vector<8xf32>
    %62 = vector.multi_reduction <add>, %61, %cst_31 [1] : vector<8x8xf32> to vector<8xf32>
    %63 = vector.shape_cast %62 : vector<8xf32> to vector<8x1xf32>
    %64 = tpu.reciprocal %63 {approx = true} : vector<8x1xf32> -> vector<8x1xf32>
    %65 = vector.broadcast %64 : vector<8x1xf32> to vector<8x8xf32>
    %66 = arith.mulf %61, %65 : vector<8x8xf32>
    %67 = arith.truncf %66 : vector<8x8xf32> to vector<8x8xbf16>
    %cst_32 = arith.constant dense<0.000000e+00> : vector<8x8xf32>
    %68 = tpu.matmul %67, %55, %cst_32 {dimension_numbers = #tpu.dot_dimension_numbers<[1], [0], [0], [1], [0, 0, 1, 1], [], []>} : vector<8x8xbf16>, vector<8x8xbf16>, vector<8x8xf32> -> vector<8x8xf32>
    %c0_33 = arith.constant 0 : index
    %c0_34 = arith.constant 0 : index
    %c16 = arith.constant 16 : index
    %69 = vector.load %arg8[%c0_33, %c0_34, %c16] : memref<1x8x32xf32, #tpu.memory_space<vmem>>, vector<1x8x8xf32>
    %70 = vector.shape_cast %69 : vector<1x8x8xf32> to vector<8x8xf32>
    %71 = vector.shape_cast %68 : vector<8x8xf32> to vector<1x8x8xf32>
    tpu.vector_store %arg8[%c0_33, %c0_34, %c16], %71 {strides = array<i32>} : memref<1x8x32xf32, #tpu.memory_space<vmem>>, vector<1x8x8xf32>,
    %72 = vector.extract_strided_slice %8 {offsets = [0, 24], sizes = [8, 8], strides = [1, 1]} : vector<8x32xbf16> to vector<8x8xbf16>
    %73 = vector.extract_strided_slice %11 {offsets = [24, 0], sizes = [8, 8], strides = [1, 1]} : vector<32x8xbf16> to vector<8x8xbf16>
    %74 = vector.extract_strided_slice %14 {offsets = [0, 24], sizes = [8, 8], strides = [1, 1]} : vector<8x32xbf16> to vector<8x8xbf16>
    %cst_35 = arith.constant dense<0.000000e+00> : vector<8x8xf32>
    %75 = tpu.matmul %72, %73, %cst_35 {dimension_numbers = #tpu.dot_dimension_numbers<[1], [0], [0], [1], [0, 0, 1, 1], [], []>} : vector<8x8xbf16>, vector<8x8xbf16>, vector<8x8xf32> -> vector<8x8xf32>
    %cst_36 = arith.constant dense<0xFF800000> : vector<8xf32>
    %76 = vector.multi_reduction <maximumf>, %75, %cst_36 [1] : vector<8x8xf32> to vector<8xf32>
    %77 = vector.shape_cast %76 : vector<8xf32> to vector<8x1xf32>
    %78 = vector.broadcast %77 : vector<8x1xf32> to vector<8x8xf32>
    %79 = arith.subf %75, %78 : vector<8x8xf32>
    %80 = math.exp %79 : vector<8x8xf32>
    %cst_37 = arith.constant dense<0.000000e+00> : vector<8xf32>
    %81 = vector.multi_reduction <add>, %80, %cst_37 [1] : vector<8x8xf32> to vector<8xf32>
    %82 = vector.shape_cast %81 : vector<8xf32> to vector<8x1xf32>
    %83 = tpu.reciprocal %82 {approx = true} : vector<8x1xf32> -> vector<8x1xf32>
    %84 = vector.broadcast %83 : vector<8x1xf32> to vector<8x8xf32>
    %85 = arith.mulf %80, %84 : vector<8x8xf32>
    %86 = arith.truncf %85 : vector<8x8xf32> to vector<8x8xbf16>
    %cst_38 = arith.constant dense<0.000000e+00> : vector<8x8xf32>
    %87 = tpu.matmul %86, %74, %cst_38 {dimension_numbers = #tpu.dot_dimension_numbers<[1], [0], [0], [1], [0, 0, 1, 1], [], []>} : vector<8x8xbf16>, vector<8x8xbf16>, vector<8x8xf32> -> vector<8x8xf32>
    %c0_39 = arith.constant 0 : index
    %c0_40 = arith.constant 0 : index
    %c24 = arith.constant 24 : index
    %88 = vector.load %arg8[%c0_39, %c0_40, %c24] : memref<1x8x32xf32, #tpu.memory_space<vmem>>, vector<1x8x8xf32>
    %89 = vector.shape_cast %88 : vector<1x8x8xf32> to vector<8x8xf32>
    %90 = vector.shape_cast %87 : vector<8x8xf32> to vector<1x8x8xf32>
    tpu.vector_store %arg8[%c0_39, %c0_40, %c24], %90 {strides = array<i32>} : memref<1x8x32xf32, #tpu.memory_space<vmem>>, vector<1x8x8xf32>,
    return
  }
  func.func @transform_0(%arg0: i32, %arg1: i32) -> (i32, i32, i32) {
    %c0_i32 = arith.constant 0 : i32
    %c0_i32_0 = arith.constant 0 : i32
    return %arg0, %arg1, %c0_i32 : i32, i32, i32
  }
  func.func @transform_1(%arg0: i32, %arg1: i32) -> (i32, i32, i32) {
    %c0_i32 = arith.constant 0 : i32
    %c0_i32_0 = arith.constant 0 : i32
    %c0_i32_1 = arith.constant 0 : i32
    return %arg0, %c0_i32, %c0_i32_0 : i32, i32, i32
  }
  func.func @transform_2(%arg0: i32, %arg1: i32) -> (i32, i32, i32) {
    %c0_i32 = arith.constant 0 : i32
    %c0_i32_0 = arith.constant 0 : i32
    %c0_i32_1 = arith.constant 0 : i32
    return %arg0, %c0_i32, %c0_i32_0 : i32, i32, i32
  }
  func.func @transform_3(%arg0: i32, %arg1: i32) -> (i32, i32) {
    %c0_i32 = arith.constant 0 : i32
    %c0_i32_0 = arith.constant 0 : i32
    %c0_i32_1 = arith.constant 0 : i32
    return %c0_i32, %c0_i32_0 : i32, i32
  }
  func.func @transform_4(%arg0: i32, %arg1: i32) -> (i32, i32) {
    %c0_i32 = arith.constant 0 : i32
    %c0_i32_0 = arith.constant 0 : i32
    %c0_i32_1 = arith.constant 0 : i32
    return %c0_i32, %c0_i32_0 : i32, i32
  }
  func.func @transform_5(%arg0: i32, %arg1: i32) -> (i32, i32) {
    %c0_i32 = arith.constant 0 : i32
    %c0_i32_0 = arith.constant 0 : i32
    %c0_i32_1 = arith.constant 0 : i32
    return %c0_i32, %c0_i32_0 : i32, i32
  }
  func.func @transform_6(%arg0: i32, %arg1: i32) -> (i32, i32, i32) {
    %c0_i32 = arith.constant 0 : i32
    %c0_i32_0 = arith.constant 0 : i32
    return %arg0, %arg1, %c0_i32 : i32, i32, i32
  }
}

</mosaic_0001>

<llo_original>
// kernel: tpu_custom_call.1
$region0: #{tpu_custom_call.1}
  #allocation0 [shape = 'u32[]', space=smem, size = 0x4, offset = 0x4, fixed_abs, tag = 'smem constant byte address 0x4 - core index']
  #allocation1 [shape = 'u32[144,128]{1,0:T(1,128)}', space=vmem, size = 0x12000, scoped, tag = 'internal scratch']
  %s0 = inlined_call_operand.hbm [shape: f32[2,8,32], index: 0, kind: input, shape index: {}]
  %s1 = inlined_call_operand.hbm [shape: f32[2,8,32], index: 1, kind: input, shape index: {}]
  %s2 = inlined_call_operand.hbm [shape: f32[2,8,32], index: 2, kind: input, shape index: {}]
  %s3 = inlined_call_operand.hbm [shape: f32[32,32], index: 3, kind: input, shape index: {}]
  %s4 = inlined_call_operand.hbm [shape: f32[32,32], index: 4, kind: input, shape index: {}]
  %s5 = inlined_call_operand.hbm [shape: f32[32,32], index: 5, kind: input, shape index: {}]
  %s6 = inlined_call_operand.hbm [shape: f32[2,8,32], index: 6, kind: output, shape index: {}]
  %s7 = sld [smem:[#allocation0]]
  $region81: #{tpu_custom_call.1} parent=0
    _
  %s9 = ssub.s32 1, %s7
  %s10 = scalar_select 0, %s9, %s7
  $region1: #{tpu_custom_call.1} parent=0
    #allocation2 [shape = 'u8[8192]{0}', space=vmem, size = 0x2000, scoped, tag = 'input window, operand 0']
    #allocation3 [shape = 's32[2]{0}', space=sflag, size = 0x8, scoped, tag = 'scoped memory for tpu_custom_call.1']
    #allocation4 [shape = 's32[2]{0}', space=sflag, size = 0x8, scoped, tag = 'scoped memory for tpu_custom_call.1']
    #allocation5 [shape = 'u8[8192]{0}', space=vmem, size = 0x2000, scoped, tag = 'input window, operand 1']
    #allocation6 [shape = 's32[2]{0}', space=sflag, size = 0x8, scoped, tag = 'scoped memory for tpu_custom_call.1']
    #allocation7 [shape = 'u8[8192]{0}', space=vmem, size = 0x2000, scoped, tag = 'input window, operand 2']
    #allocation8 [shape = 'u8[16384]{0}', space=vmem, size = 0x4000, scoped, tag = 'input window, operand 3, single buffered']
    #allocation9 [shape = 's32[1]{0}', space=sflag, size = 0x4, scoped, tag = 'scoped memory for tpu_custom_call.1']
    #allocation10 [shape = 'u8[16384]{0}', space=vmem, size = 0x4000, scoped, tag = 'input window, operand 4, single buffered']
    #allocation11 [shape = 'u8[16384]{0}', space=vmem, size = 0x4000, scoped, tag = 'input window, operand 5, single buffered']
    #allocation12 [shape = 's32[1]{0}', space=sflag, size = 0x4, scoped, tag = 'scoped memory for tpu_custom_call.1']
    #allocation13 [shape = 'u8[8192]{0}', space=vmem, size = 0x2000, scoped, tag = 'output window, operand 0']
    %11 = vsyncpa [#allocation3], 0
    %s12 = scalar_lea.sflag [#allocation3], 1
    %13 = vsyncpa %s12, 0
    %14 = vsyncpa [#allocation6], 0
    %s15 = scalar_lea.sflag [#allocation6], 1
    %16 = vsyncpa %s15, 0
    %17 = vsyncpa [#allocation9], 0
    %18 = vsyncpa [#allocation12], 0
    %19 = vsyncpa [#allocation4], 0
    %s20 = scalar_lea.sflag [#allocation4], 1
    %21 = vsyncpa %s20, 0
    loop: start=0, step=1, limit=4
    $region2: #{tpu_custom_call.1} parent=1 // loop_pre_header
      _
    $region3: #{tpu_custom_call.1} parent=1 // loop_header
      %s23 = sphi 0, %s27
      %p24 = scmp.ge.s32.totalorder %s23, 4
      %s30 = sphi 0, %s42
      %s31 = sphi 0, %s38
      %s32 = sphi 0, %s30
      %s33 = sphi 0, %s31
      %s34 = sphi 0, %s32
      %s35 = sphi 0, %s33
      %s47 = sphi 0, %s49
      %s50 = sphi 0, %s47
      %s51 = sphi 0, %s50
      %s67 = sphi 0, %s51
      %s73 = sphi 0, %s75
      %s76 = sphi 0, %s73
      %s77 = sphi 0, %s76
      %s93 = sphi 0, %s77
      %s99 = sphi 0, %s101
      %s102 = sphi 0, %s99
      %s103 = sphi 0, %s102
      %s119 = sphi 0, %s103
      %s123 = sphi 0, %s123
      %s125 = sphi 0, %s123
      %s126 = sphi 0, %s125
      %s140 = sphi 0, %s126
      %s144 = sphi 0, %s144
      %s146 = sphi 0, %s144
      %s147 = sphi 0, %s146
      %s161 = sphi 0, %s147
      %s165 = sphi 0, %s165
      %s167 = sphi 0, %s165
      %s168 = sphi 0, %s167
      %s182 = sphi 0, %s168
      %s190 = sphi 0, %s192
      %s193 = sphi 0, %s190
      %s194 = sphi 0, %s193
      %s210 = sphi 0, %s194
    $region4: #{tpu_custom_call.1} parent=1 // loop_header_branch
      %26 = sbr.rel (%p24) target = $region8
    $region5: #{tpu_custom_call.1} parent=1 // loop_body
      %s28 = ssub.s32 %s23, 1
      %s29 = ssub.s32 %s23, 2
      %s36 = sadd.s32 1, %s31
      %p37 = scmp.ge.s32.totalorder %s36, 1
      %s38 = scalar_select %p37, 0, %s36
      %s39 = sadd.s32 1, %s30
      %s40 = scalar_select %p37, %s39, %s30
      %p41 = scmp.ge.s32.totalorder %s40, 2
      %s42 = scalar_select %p41, 0, %s40
      %s43 = ssub.s32 %s30, %s42
      %s44 = ssub.s32 %s31, %s38
      %s45 = sor.u32 %s43, %s44
      %p46 = scmp.eq.s32.totalorder %s45, 0
      %s48 = sadd.s32 %s47, 1
      %s49 = scalar_select %p46, %s47, %s48
      %p52 = pneg %p46
      %p53 = scmp.eq.s32.totalorder %s23, 1
      %p54 = por %p52, %p53
      %p55 = scmp.ne.s32.totalorder %s47, %s50
      %p56 = scmp.eq.s32.totalorder %s23, 0
      %p57 = por %p55, %p56
      %p58 = scmp.ne.s32.totalorder %s47, %s50
      %p59 = scmp.eq.s32.totalorder %s28, 1
      %p60 = por %p58, %p59
      %p61 = scmp.ne.s32.totalorder %s50, %s51
      %p62 = scmp.eq.s32.totalorder %s28, 0
      %p63 = por %p61, %p62
      %p64 = scmp.ne.s32.totalorder %s50, %s51
      %p65 = scmp.eq.s32.totalorder %s29, 1
      %p66 = por %p64, %p65
      %p68 = scmp.ne.s32.totalorder %s51, %s67
      %p69 = scmp.eq.s32.totalorder %s29, 0
      %p70 = por %p68, %p69
      %s71 = ssub.s32 %s30, %s42
      %p72 = scmp.eq.s32.totalorder %s71, 0
      %s74 = sadd.s32 %s73, 1
      %s75 = scalar_select %p72, %s73, %s74
      %p78 = pneg %p72
      %p79 = scmp.eq.s32.totalorder %s23, 1
      %p80 = por %p78, %p79
      %p81 = scmp.ne.s32.totalorder %s73, %s76
      %p82 = scmp.eq.s32.totalorder %s23, 0
      %p83 = por %p81, %p82
      %p84 = scmp.ne.s32.totalorder %s73, %s76
      %p85 = scmp.eq.s32.totalorder %s28, 1
      %p86 = por %p84, %p85
      %p87 = scmp.ne.s32.totalorder %s76, %s77
      %p88 = scmp.eq.s32.totalorder %s28, 0
      %p89 = por %p87, %p88
      %p90 = scmp.ne.s32.totalorder %s76, %s77
      %p91 = scmp.eq.s32.totalorder %s29, 1
      %p92 = por %p90, %p91
      %p94 = scmp.ne.s32.totalorder %s77, %s93
      %p95 = scmp.eq.s32.totalorder %s29, 0
      %p96 = por %p94, %p95
      %s97 = ssub.s32 %s30, %s42
      %p98 = scmp.eq.s32.totalorder %s97, 0
      %s100 = sadd.s32 %s99, 1
      %s101 = scalar_select %p98, %s99, %s100
      %p104 = pneg %p98
      %p105 = scmp.eq.s32.totalorder %s23, 1
      %p106 = por %p104, %p105
      %p107 = scmp.ne.s32.totalorder %s99, %s102
      %p108 = scmp.eq.s32.totalorder %s23, 0
      %p109 = por %p107, %p108
      %p110 = scmp.ne.s32.totalorder %s99, %s102
      %p111 = scmp.eq.s32.totalorder %s28, 1
      %p112 = por %p110, %p111
      %p113 = scmp.ne.s32.totalorder %s102, %s103
      %p114 = scmp.eq.s32.totalorder %s28, 0
      %p115 = por %p113, %p114
      %p116 = scmp.ne.s32.totalorder %s102, %s103
      %p117 = scmp.eq.s32.totalorder %s29, 1
      %p118 = por %p116, %p117
      %p120 = scmp.ne.s32.totalorder %s103, %s119
      %p121 = scmp.eq.s32.totalorder %s29, 0
      %p122 = por %p120, %p121
      %s124 = sadd.s32 %s123, 1
      %p127 = scmp.eq.s32.totalorder %s23, 1
      %p128 = scmp.ne.s32.totalorder %s123, %s125
      %p129 = scmp.eq.s32.totalorder %s23, 0
      %p130 = por %p128, %p129
      %p131 = scmp.ne.s32.totalorder %s123, %s125
      %p132 = scmp.eq.s32.totalorder %s28, 1
      %p133 = por %p131, %p132
      %p134 = scmp.ne.s32.totalorder %s125, %s126
      %p135 = scmp.eq.s32.totalorder %s28, 0
      %p136 = por %p134, %p135
      %p137 = scmp.ne.s32.totalorder %s125, %s126
      %p138 = scmp.eq.s32.totalorder %s29, 1
      %p139 = por %p137, %p138
      %p141 = scmp.ne.s32.totalorder %s126, %s140
      %p142 = scmp.eq.s32.totalorder %s29, 0
      %p143 = por %p141, %p142
      %s145 = sadd.s32 %s144, 1
      %p148 = scmp.eq.s32.totalorder %s23, 1
      %p149 = scmp.ne.s32.totalorder %s144, %s146
      %p150 = scmp.eq.s32.totalorder %s23, 0
      %p151 = por %p149, %p150
      %p152 = scmp.ne.s32.totalorder %s144, %s146
      %p153 = scmp.eq.s32.totalorder %s28, 1
      %p154 = por %p152, %p153
      %p155 = scmp.ne.s32.totalorder %s146, %s147
      %p156 = scmp.eq.s32.totalorder %s28, 0
      %p157 = por %p155, %p156
      %p158 = scmp.ne.s32.totalorder %s146, %s147
      %p159 = scmp.eq.s32.totalorder %s29, 1
      %p160 = por %p158, %p159
      %p162 = scmp.ne.s32.totalorder %s147, %s161
      %p163 = scmp.eq.s32.totalorder %s29, 0
      %p164 = por %p162, %p163
      %s166 = sadd.s32 %s165, 1
      %p169 = scmp.eq.s32.totalorder %s23, 1
      %p170 = scmp.ne.s32.totalorder %s165, %s167
      %p171 = scmp.eq.s32.totalorder %s23, 0
      %p172 = por %p170, %p171
      %p173 = scmp.ne.s32.totalorder %s165, %s167
      %p174 = scmp.eq.s32.totalorder %s28, 1
      %p175 = por %p173, %p174
      %p176 = scmp.ne.s32.totalorder %s167, %s168
      %p177 = scmp.eq.s32.totalorder %s28, 0
      %p178 = por %p176, %p177
      %p179 = scmp.ne.s32.totalorder %s167, %s168
      %p180 = scmp.eq.s32.totalorder %s29, 1
      %p181 = por %p179, %p180
      %p183 = scmp.ne.s32.totalorder %s168, %s182
      %p184 = scmp.eq.s32.totalorder %s29, 0
      %p185 = por %p183, %p184
      %s186 = ssub.s32 %s30, %s42
      %s187 = ssub.s32 %s31, %s38
      %s188 = sor.u32 %s186, %s187
      %p189 = scmp.eq.s32.totalorder %s188, 0
      %s191 = sadd.s32 %s190, 1
      %s192 = scalar_select %p189, %s190, %s191
      %p195 = pneg %p189
      %p196 = scmp.eq.s32.totalorder %s23, 1
      %p197 = por %p195, %p196
      %p198 = scmp.ne.s32.totalorder %s190, %s193
      %p199 = scmp.eq.s32.totalorder %s23, 0
      %p200 = por %p198, %p199
      %p201 = scmp.ne.s32.totalorder %s190, %s193
      %p202 = scmp.eq.s32.totalorder %s28, 1
      %p203 = por %p201, %p202
      %p204 = scmp.ne.s32.totalorder %s193, %s194
      %p205 = scmp.eq.s32.totalorder %s28, 0
      %p206 = por %p204, %p205
      %p207 = scmp.ne.s32.totalorder %s193, %s194
      %p208 = scmp.eq.s32.totalorder %s29, 1
      %p209 = por %p207, %p208
      %p211 = scmp.ne.s32.totalorder %s194, %s210
      %p212 = scmp.eq.s32.totalorder %s29, 0
      %p213 = por %p211, %p212
      %p214 = scmp.le.s32.totalorder 1, %s23
      %p215 = scmp.lt.s32.totalorder %s23, 3
      %p216 = pnand %p214, %p215
      %p217 = pneg %p216
      // Predicated region
      $region9: #{tpu_custom_call.1} parent=5 // pred_check
        _
      $region10: #{tpu_custom_call.1} parent=5 // pred_check_branch
        %219 = sbr.rel (%p216) target = $region12
      $region11: #{tpu_custom_call.1} parent=5 // pred_region
        %s220 = ssub.s32 %s23, 1
        // Predicated region
        $region13: #{tpu_custom_call.1} parent=11 // pred_check
          %p221 = pneg %p136
        $region14: #{tpu_custom_call.1} parent=11 // pred_check_branch
          %223 = sbr.rel (%p221) target = $region16
        $region15: #{tpu_custom_call.1} parent=11 // pred_region
          %s225 = ssub.s32 512, 512
          %226 = vsyncadd [#allocation9], %s225
          %s227 = sshll.u32 [#allocation8], 4
          %s228 = int_to_ptr.vmem [resolvable:$true] %s227
          %233 = dma.hbm_to_vmem [thread:$0]  %s3, 512, %s228, [#allocation9], 128, 128, 8
        $region16: #{tpu_custom_call.1} parent=11 // pred_fallthru
          _
        // Predicated region
        $region17: #{tpu_custom_call.1} parent=11 // pred_check
          %p234 = pneg %p157
        $region18: #{tpu_custom_call.1} parent=11 // pred_check_branch
          %236 = sbr.rel (%p234) target = $region20
        $region19: #{tpu_custom_call.1} parent=11 // pred_region
          %s238 = ssub.s32 512, 512
          %239 = vsyncadd [#allocation9], %s238
          %s240 = sshll.u32 [#allocation10], 4
          %s241 = int_to_ptr.vmem [resolvable:$true] %s240
          %246 = dma.hbm_to_vmem [thread:$0]  %s4, 512, %s241, [#allocation9], 128, 128, 8
        $region20: #{tpu_custom_call.1} parent=11 // pred_fallthru
          _
        // Predicated region
        $region21: #{tpu_custom_call.1} parent=11 // pred_check
          %p247 = pneg %p178
        $region22: #{tpu_custom_call.1} parent=11 // pred_check_branch
          %249 = sbr.rel (%p247) target = $region24
        $region23: #{tpu_custom_call.1} parent=11 // pred_region
          %s251 = ssub.s32 512, 512
          %252 = vsyncadd [#allocation12], %s251
          %s253 = sshll.u32 [#allocation11], 4
          %s254 = int_to_ptr.vmem [resolvable:$true] %s253
          %259 = dma.hbm_to_vmem [thread:$0]  %s5, 512, %s254, [#allocation12], 128, 128, 8
        $region24: #{tpu_custom_call.1} parent=11 // pred_fallthru
          _
      $region12: #{tpu_custom_call.1} parent=5 // pred_fallthru
        _
      %p260 = scmp.lt.s32.totalorder %s23, 2
      // Predicated region
      $region25: #{tpu_custom_call.1} parent=5 // pred_check
        %p261 = pneg %p260
      $region26: #{tpu_custom_call.1} parent=5 // pred_check_branch
        %263 = sbr.rel (%p261) target = $region28
      $region27: #{tpu_custom_call.1} parent=5 // pred_region
        // Predicated region
        $region29: #{tpu_custom_call.1} parent=27 // pred_check
          %p264 = pneg %p57
        $region30: #{tpu_custom_call.1} parent=27 // pred_check_branch
          %266 = sbr.rel (%p264) target = $region32
        $region31: #{tpu_custom_call.1} parent=27 // pred_region
          %s267 = sand.u32 %s47, 1
          %s268 = scalar_lea.sflag [#allocation3], %s267
          %s269 = sand.u32 %s47, 1
          %s270 = smul.addr %s269, 8
          %s271 = scalar_lea.vmem [#allocation2], %s270
          %s273 = ssub.s32 128, 128
          %274 = vsyncadd %s268, %s273
          %s275 = sadd.s32 %s31, %s30
          %s276 = smul.addr %s275, 128
          %s277 = scalar_lea.hbm %s0, %s276
          %s279 = sshll.u32 %s271, 4
          %s280 = int_to_ptr.vmem [resolvable:$true] %s279
          %282 = dma.hbm_to_vmem [thread:$0]  %s277, 128, %s280, %s268
        $region32: #{tpu_custom_call.1} parent=27 // pred_fallthru
          _
        // Predicated region
        $region33: #{tpu_custom_call.1} parent=27 // pred_check
          %p283 = pneg %p83
        $region34: #{tpu_custom_call.1} parent=27 // pred_check_branch
          %285 = sbr.rel (%p283) target = $region36
        $region35: #{tpu_custom_call.1} parent=27 // pred_region
          %s286 = sand.u32 %s23, 1
          %s287 = scalar_lea.sflag [#allocation6], %s286
          %s288 = sand.u32 %s73, 1
          %s289 = smul.addr %s288, 8
          %s290 = scalar_lea.vmem [#allocation5], %s289
          %s292 = ssub.s32 128, 128
          %293 = vsyncadd %s287, %s292
          %s294 = smul.addr %s30, 128
          %s295 = scalar_lea.hbm %s1, %s294
          %s297 = sshll.u32 %s290, 4
          %s298 = int_to_ptr.vmem [resolvable:$true] %s297
          %300 = dma.hbm_to_vmem [thread:$0]  %s295, 128, %s298, %s287
        $region36: #{tpu_custom_call.1} parent=27 // pred_fallthru
          _
        // Predicated region
        $region37: #{tpu_custom_call.1} parent=27 // pred_check
          %p301 = pneg %p109
        $region38: #{tpu_custom_call.1} parent=27 // pred_check_branch
          %303 = sbr.rel (%p301) target = $region40
        $region39: #{tpu_custom_call.1} parent=27 // pred_region
          %s304 = sand.u32 %s23, 1
          %s305 = scalar_lea.sflag [#allocation6], %s304
          %s306 = sand.u32 %s99, 1
          %s307 = smul.addr %s306, 8
          %s308 = scalar_lea.vmem [#allocation7], %s307
          %s310 = ssub.s32 128, 128
          %311 = vsyncadd %s305, %s310
          %s312 = smul.addr %s30, 128
          %s313 = scalar_lea.hbm %s2, %s312
          %s315 = sshll.u32 %s308, 4
          %s316 = int_to_ptr.vmem [resolvable:$true] %s315
          %318 = dma.hbm_to_vmem [thread:$0]  %s313, 128, %s316, %s305
        $region40: #{tpu_custom_call.1} parent=27 // pred_fallthru
          _
      $region28: #{tpu_custom_call.1} parent=5 // pred_fallthru
        _
      %p319 = scmp.le.s32.totalorder 1, %s23
      %p320 = scmp.lt.s32.totalorder %s23, 3
      %p321 = pnand %p319, %p320
      %p322 = pneg %p321
      // Predicated region
      $region41: #{tpu_custom_call.1} parent=5 // pred_check
        _
      $region42: #{tpu_custom_call.1} parent=5 // pred_check_branch
        %324 = sbr.rel (%p321) target = $region44
      $region43: #{tpu_custom_call.1} parent=5 // pred_region
        %s325 = ssub.s32 %s23, 1
        %s326 = sand.u32 %s50, 1
        %s327 = scalar_lea.sflag [#allocation3], %s326
        %s328 = sand.u32 %s50, 1
        %s329 = smul.addr %s328, 8
        %s330 = scalar_lea.vmem [#allocation2], %s329
        // Predicated region
        $region45: #{tpu_custom_call.1} parent=43 // pred_check
          %p331 = pneg %p63
        $region46: #{tpu_custom_call.1} parent=43 // pred_check_branch
          %333 = sbr.rel (%p331) target = $region48
        $region47: #{tpu_custom_call.1} parent=43 // pred_region
          %334 = dma.done %s327, 128
        $region48: #{tpu_custom_call.1} parent=43 // pred_fallthru
          _
        %s335 = sand.u32 %s28, 1
        %s336 = scalar_lea.sflag [#allocation6], %s335
        %s337 = sand.u32 %s76, 1
        %s338 = smul.addr %s337, 8
        %s339 = scalar_lea.vmem [#allocation5], %s338
        // Predicated region
        $region49: #{tpu_custom_call.1} parent=43 // pred_check
          %p340 = pneg %p89
        $region50: #{tpu_custom_call.1} parent=43 // pred_check_branch
          %342 = sbr.rel (%p340) target = $region52
        $region51: #{tpu_custom_call.1} parent=43 // pred_region
          %343 = dma.done %s336, 128
        $region52: #{tpu_custom_call.1} parent=43 // pred_fallthru
          _
        %s344 = sand.u32 %s28, 1
        %s345 = scalar_lea.sflag [#allocation6], %s344
        %s346 = sand.u32 %s102, 1
        %s347 = smul.addr %s346, 8
        %s348 = scalar_lea.vmem [#allocation7], %s347
        // Predicated region
        $region53: #{tpu_custom_call.1} parent=43 // pred_check
          %p349 = pneg %p115
        $region54: #{tpu_custom_call.1} parent=43 // pred_check_branch
          %351 = sbr.rel (%p349) target = $region56
        $region55: #{tpu_custom_call.1} parent=43 // pred_region
          %352 = dma.done %s345, 128
        $region56: #{tpu_custom_call.1} parent=43 // pred_fallthru
          _
        // Predicated region
        $region57: #{tpu_custom_call.1} parent=43 // pred_check
          %p353 = pneg %p136
        $region58: #{tpu_custom_call.1} parent=43 // pred_check_branch
          %355 = sbr.rel (%p353) target = $region60
        $region59: #{tpu_custom_call.1} parent=43 // pred_region
          %356 = dma.done [#allocation9], 512
        $region60: #{tpu_custom_call.1} parent=43 // pred_fallthru
          _
        // Predicated region
        $region61: #{tpu_custom_call.1} parent=43 // pred_check
          %p357 = pneg %p157
        $region62: #{tpu_custom_call.1} parent=43 // pred_check_branch
          %359 = sbr.rel (%p357) target = $region64
        $region63: #{tpu_custom_call.1} parent=43 // pred_region
          %360 = dma.done [#allocation9], 512
        $region64: #{tpu_custom_call.1} parent=43 // pred_fallthru
          _
        // Predicated region
        $region65: #{tpu_custom_call.1} parent=43 // pred_check
          %p361 = pneg %p178
        $region66: #{tpu_custom_call.1} parent=43 // pred_check_branch
          %363 = sbr.rel (%p361) target = $region68
        $region67: #{tpu_custom_call.1} parent=43 // pred_region
          %364 = dma.done [#allocation12], 512
        $region68: #{tpu_custom_call.1} parent=43 // pred_fallthru
          _
        %s365 = sand.u32 %s50, 1
        %s366 = scalar_lea.sflag [#allocation3], %s365
        %s367 = sand.u32 %s50, 1
        %s368 = smul.addr %s367, 8
        %s369 = scalar_lea.vmem [#allocation2], %s368
        %p370 = pneg %p63
        %p371 = pneg %p60
        %s372 = sand.u32 %s28, 1
        %s373 = scalar_lea.sflag [#allocation6], %s372
        %s374 = sand.u32 %s76, 1
        %s375 = smul.addr %s374, 8
        %s376 = scalar_lea.vmem [#allocation5], %s375
        %p377 = pneg %p89
        %p378 = pneg %p86
        %s379 = sand.u32 %s28, 1
        %s380 = scalar_lea.sflag [#allocation6], %s379
        %s381 = sand.u32 %s102, 1
        %s382 = smul.addr %s381, 8
        %s383 = scalar_lea.vmem [#allocation7], %s382
        %p384 = pneg %p115
        %p385 = pneg %p112
        %p386 = pneg %p136
        %p387 = pneg %p133
        %p388 = pneg %p157
        %p389 = pneg %p154
        %p390 = pneg %p178
        %p391 = pneg %p175
        %p392 = pneg %p206
        %p393 = pneg %p203
        %s394 = sand.u32 %s193, 1
        %s395 = scalar_lea.sflag [#allocation4], %s394
        %s396 = sand.u32 %s193, 1
        %s397 = smul.addr %s396, 8
        %s398 = scalar_lea.vmem [#allocation13], %s397
        %v400 = vld [vmem:[%s330] sm:$0xff]
        %v401 = vld [vmem:[%s339] sm:$0xff]
        %v402 = vld [vmem:[%s348] sm:$0xff]
        %v403 = vld [vmem:[#allocation8] sm:$0xff]
        %v404 = vld [vmem:[#allocation8 + $0x8] sm:$0xff]
        %v405 = vld [vmem:[#allocation8 + $0x10] sm:$0xff]
        %v406 = vld [vmem:[#allocation8 + $0x18] sm:$0xff]
        %vm407 = vcmask 261120
        %v409 = vsel %vm407, %v400, 0
        %411 = vmatprep.subr.mxu0 0.0
        %412 = vmatpush1.msra.mxu0 %v403
        %413 = vmatprep.subr.mxu0 0.0
        %414 = vmatpush1.msra.mxu0 %v404
        %415 = vmatprep.subr.mxu0 0.0
        %416 = vmatpush1.msra.mxu0 %v405
        %417 = vmatprep.subr.mxu0 0.0
        %418 = vmatpush1.msra.mxu0 %v406
        %419 = vmatprep.subr.mxu0 0.0
        %420 = vmatpush1.msra.mxu0 0.0
        %421 = vmatprep.subr.mxu0 0.0
        %422 = vmatpush1.msra.mxu0 0.0
        %423 = vmatprep.subr.mxu0 0.0
        %424 = vmatpush1.msra.mxu0 0.0
        %425 = vmatprep.subr.mxu0 0.0
        %426 = vmatpush1.msra.mxu0 0.0
        %427 = vmatprep.subr.mxu0 0.0
        %428 = vmatpush1.msra.mxu0 0.0
        %429 = vmatprep.subr.mxu0 0.0
        %430 = vmatpush1.msra.mxu0 0.0
        %431 = vmatprep.subr.mxu0 0.0
        %432 = vmatpush1.msra.mxu0 0.0
        %433 = vmatprep.subr.mxu0 0.0
        %434 = vmatpush1.msra.mxu0 0.0
        %435 = vmatprep.subr.mxu0 0.0
        %436 = vmatpush1.msra.mxu0 0.0
        %437 = vmatprep.subr.mxu0 0.0
        %438 = vmatpush1.msra.mxu0 0.0
        %439 = vmatprep.subr.mxu0 0.0
        %440 = vmatpush1.msra.mxu0 0.0
        %441 = vmatprep.subr.mxu0 0.0
        %442 = vmatpush1.msra.mxu0 0.0
        %443 = vmatprep.subr.mxu0 0.0
        %444 = vmatpush1.msra.mxu0 0.0
        %445 = vmatprep.subr.mxu0 0.0
        %446 = vmatpush1.msra.mxu0 0.0
        %447 = vmatprep.subr.mxu0 0.0
        %448 = vmatpush1.msra.mxu0 0.0
        %449 = vmatprep.subr.mxu0 0.0
        %450 = vmatpush1.msra.mxu0 0.0
        %451 = vmatprep.subr.mxu0 0.0
        %452 = vmatpush1.msra.mxu0 0.0
        %453 = vmatprep.subr.mxu0 0.0
        %454 = vmatpush1.msra.mxu0 0.0
        %455 = vmatprep.subr.mxu0 0.0
        %456 = vmatpush1.msra.mxu0 0.0
        %457 = vmatprep.subr.mxu0 0.0
        %458 = vmatpush1.msra.mxu0 0.0
        %459 = vmatprep.subr.mxu0 0.0
        %460 = vmatpush1.msra.mxu0 0.0
        %461 = vmatprep.subr.mxu0 0.0
        %462 = vmatpush1.msra.mxu0 0.0
        %463 = vmatprep.subr.mxu0 0.0
        %464 = vmatpush1.msra.mxu0 0.0
        %465 = vmatprep.subr.mxu0 0.0
        %466 = vmatpush1.msra.mxu0 0.0
        %467 = vmatprep.subr.mxu0 0.0
        %468 = vmatpush1.msra.mxu0 0.0
        %469 = vmatprep.subr.mxu0 0.0
        %470 = vmatpush1.msra.mxu0 0.0
        %471 = vmatprep.subr.mxu0 0.0
        %472 = vmatpush1.msra.mxu0 0.0
        %473 = vmatprep.subr.mxu0 0.0
        %474 = vmatpush1.msra.mxu0 0.0
        %475 = vmatprep.mubr.f32.mxu0 0.0
        %476 = vmatmul.mubr.f32.gmra.mrb[0].mxu0 %v409
        %v477 = vpop.f32.mrb[0].mxu0
        %v478 = vadd.f32 0.0, %v477
        %v479 = vpop.f32.mrb[0].mxu0
        %480 = vdwg.mxu0
        %v481 = vpack.c.bf16 %v478, %v478
        %v482 = vld [vmem:[#allocation10] sm:$0xff]
        %v483 = vld [vmem:[#allocation10 + $0x8] sm:$0xff]
        %v484 = vld [vmem:[#allocation10 + $0x10] sm:$0xff]
        %v485 = vld [vmem:[#allocation10 + $0x18] sm:$0xff]
        %486 = vxpose.xlu0.b32.start [1/16] %v482, 128
        %487 = vxpose.xlu0.b32.cont [2/16] %v483, 128
        %488 = vxpose.xlu0.b32.cont [3/16] %v484, 128
        %489 = vxpose.xlu0.b32.cont [4/16] %v485, 128
        %490 = vxpose.xlu0.b32.cont [5/16] 0.0, 128
        %491 = vxpose.xlu0.b32.cont [6/16] 0.0, 128
        %492 = vxpose.xlu0.b32.cont [7/16] 0.0, 128
        %493 = vxpose.xlu0.b32.cont [8/16] 0.0, 128
        %494 = vxpose.xlu0.b32.cont [9/16] 0.0, 128
        %495 = vxpose.xlu0.b32.cont [10/16] 0.0, 128
        %496 = vxpose.xlu0.b32.cont [11/16] 0.0, 128
        %497 = vxpose.xlu0.b32.cont [12/16] 0.0, 128
        %498 = vxpose.xlu0.b32.cont [13/16] 0.0, 128
        %499 = vxpose.xlu0.b32.cont [14/16] 0.0, 128
        %500 = vxpose.xlu0.b32.cont [15/16] 0.0, 128
        %501 = vxpose.xlu0.b32.end [16/16] 0.0, 128
        %v502 = vpop.trf.xlu0
        %v503 = vpop.trf.xlu0
        %v504 = vpop.trf.xlu0
        %v505 = vpop.trf.xlu0
        %v506 = vpop.trf.xlu0
        %v507 = vpop.trf.xlu0
        %v508 = vpop.trf.xlu0
        %v509 = vpop.trf.xlu0
        %v510 = vpop.trf.xlu0
        %v511 = vpop.trf.xlu0
        %v512 = vpop.trf.xlu0
        %v513 = vpop.trf.xlu0
        %v514 = vpop.trf.xlu0
        %v515 = vpop.trf.xlu0
        %v516 = vpop.trf.xlu0
        %v517 = vpop.trf.xlu0
        %v519 = vsel %vm407, %v502, 0
        %v522 = vsel %vm407, %v503, 0
        %v525 = vsel %vm407, %v504, 0
        %v528 = vsel %vm407, %v505, 0
        %v531 = vsel %vm407, %v401, 0
        %533 = vmatprep.subr.mxu0 0.0
        %534 = vmatpush1.xpose.msra.mxu0 %v531
        %535 = vmatprep.subr.mxu0 0.0
        %536 = vmatpush1.xpose.msra.mxu0 0.0
        %537 = vmatprep.subr.mxu0 0.0
        %538 = vmatpush1.xpose.msra.mxu0 0.0
        %539 = vmatprep.subr.mxu0 0.0
        %540 = vmatpush1.xpose.msra.mxu0 0.0
        %541 = vmatprep.subr.mxu0 0.0
        %542 = vmatpush1.xpose.msra.mxu0 0.0
        %543 = vmatprep.subr.mxu0 0.0
        %544 = vmatpush1.xpose.msra.mxu0 0.0
        %545 = vmatprep.subr.mxu0 0.0
        %546 = vmatpush1.xpose.msra.mxu0 0.0
        %547 = vmatprep.subr.mxu0 0.0
        %548 = vmatpush1.xpose.msra.mxu0 0.0
        %549 = vmatprep.subr.mxu0 0.0
        %550 = vmatpush1.xpose.msra.mxu0 0.0
        %551 = vmatprep.subr.mxu0 0.0
        %552 = vmatpush1.xpose.msra.mxu0 0.0
        %553 = vmatprep.subr.mxu0 0.0
        %554 = vmatpush1.xpose.msra.mxu0 0.0
        %555 = vmatprep.subr.mxu0 0.0
        %556 = vmatpush1.xpose.msra.mxu0 0.0
        %557 = vmatprep.subr.mxu0 0.0
        %558 = vmatpush1.xpose.msra.mxu0 0.0
        %559 = vmatprep.subr.mxu0 0.0
        %560 = vmatpush1.xpose.msra.mxu0 0.0
        %561 = vmatprep.subr.mxu0 0.0
        %562 = vmatpush1.xpose.msra.mxu0 0.0
        %563 = vmatprep.subr.mxu0 0.0
        %564 = vmatpush1.xpose.msra.mxu0 0.0
        %565 = vmatprep.subr.mxu0 0.0
        %566 = vmatpush1.xpose.msra.mxu0 0.0
        %567 = vmatprep.subr.mxu0 0.0
        %568 = vmatpush1.xpose.msra.mxu0 0.0
        %569 = vmatprep.subr.mxu0 0.0
        %570 = vmatpush1.xpose.msra.mxu0 0.0
        %571 = vmatprep.subr.mxu0 0.0
        %572 = vmatpush1.xpose.msra.mxu0 0.0
        %573 = vmatprep.subr.mxu0 0.0
        %574 = vmatpush1.xpose.msra.mxu0 0.0
        %575 = vmatprep.subr.mxu0 0.0
        %576 = vmatpush1.xpose.msra.mxu0 0.0
        %577 = vmatprep.subr.mxu0 0.0
        %578 = vmatpush1.xpose.msra.mxu0 0.0
        %579 = vmatprep.subr.mxu0 0.0
        %580 = vmatpush1.xpose.msra.mxu0 0.0
        %581 = vmatprep.subr.mxu0 0.0
        %582 = vmatpush1.xpose.msra.mxu0 0.0
        %583 = vmatprep.subr.mxu0 0.0
        %584 = vmatpush1.xpose.msra.mxu0 0.0
        %585 = vmatprep.subr.mxu0 0.0
        %586 = vmatpush1.xpose.msra.mxu0 0.0
        %587 = vmatprep.subr.mxu0 0.0
        %588 = vmatpush1.xpose.msra.mxu0 0.0
        %589 = vmatprep.subr.mxu0 0.0
        %590 = vmatpush1.xpose.msra.mxu0 0.0
        %591 = vmatprep.subr.mxu0 0.0
        %592 = vmatpush1.xpose.msra.mxu0 0.0
        %593 = vmatprep.subr.mxu0 0.0
        %594 = vmatpush1.xpose.msra.mxu0 0.0
        %595 = vmatprep.subr.mxu0 0.0
        %596 = vmatpush1.xpose.msra.mxu0 0.0
        %597 = vmatprep.mubr.f32.mxu0 0.0
        %598 = vmatmul.mubr.f32.gmra.mrb[0].mxu0 %v519
        %v599 = vpop.f32.mrb[0].mxu0
        %v600 = vadd.f32 0.0, %v599
        %v601 = vpop.f32.mrb[0].mxu0
        %602 = vmatprep.mubr.f32.mxu0 0.0
        %603 = vmatmul.mubr.f32.gmra.mrb[0].mxu0 %v522
        %v604 = vpop.f32.mrb[0].mxu0
        %v605 = vadd.f32 0.0, %v604
        %v606 = vpop.f32.mrb[0].mxu0
        %607 = vmatprep.mubr.f32.mxu0 0.0
        %608 = vmatmul.mubr.f32.gmra.mrb[0].mxu0 %v525
        %v609 = vpop.f32.mrb[0].mxu0
        %v610 = vadd.f32 0.0, %v609
        %v611 = vpop.f32.mrb[0].mxu0
        %612 = vmatprep.mubr.f32.mxu0 0.0
        %613 = vmatmul.mubr.f32.gmra.mrb[0].mxu0 %v528
        %v614 = vpop.f32.mrb[0].mxu0
        %v615 = vadd.f32 0.0, %v614
        %v616 = vpop.f32.mrb[0].mxu0
        %617 = vdwg.mxu0
        %v618 = vpack.c.bf16 %v605, %v600
        %v619 = vpack.c.bf16 %v615, %v610
        %v620 = vld [vmem:[#allocation11] sm:$0xff]
        %v621 = vld [vmem:[#allocation11 + $0x8] sm:$0xff]
        %v622 = vld [vmem:[#allocation11 + $0x10] sm:$0xff]
        %v623 = vld [vmem:[#allocation11 + $0x18] sm:$0xff]
        %v625 = vsel %vm407, %v402, 0
        %627 = vmatprep.subr.mxu0 0.0
        %628 = vmatpush1.msra.mxu0 %v620
        %629 = vmatprep.subr.mxu0 0.0
        %630 = vmatpush1.msra.mxu0 %v621
        %631 = vmatprep.subr.mxu0 0.0
        %632 = vmatpush1.msra.mxu0 %v622
        %633 = vmatprep.subr.mxu0 0.0
        %634 = vmatpush1.msra.mxu0 %v623
        %635 = vmatprep.subr.mxu0 0.0
        %636 = vmatpush1.msra.mxu0 0.0
        %637 = vmatprep.subr.mxu0 0.0
        %638 = vmatpush1.msra.mxu0 0.0
        %639 = vmatprep.subr.mxu0 0.0
        %640 = vmatpush1.msra.mxu0 0.0
        %641 = vmatprep.subr.mxu0 0.0
        %642 = vmatpush1.msra.mxu0 0.0
        %643 = vmatprep.subr.mxu0 0.0
        %644 = vmatpush1.msra.mxu0 0.0
        %645 = vmatprep.subr.mxu0 0.0
        %646 = vmatpush1.msra.mxu0 0.0
        %647 = vmatprep.subr.mxu0 0.0
        %648 = vmatpush1.msra.mxu0 0.0
        %649 = vmatprep.subr.mxu0 0.0
        %650 = vmatpush1.msra.mxu0 0.0
        %651 = vmatprep.subr.mxu0 0.0
        %652 = vmatpush1.msra.mxu0 0.0
        %653 = vmatprep.subr.mxu0 0.0
        %654 = vmatpush1.msra.mxu0 0.0
        %655 = vmatprep.subr.mxu0 0.0
        %656 = vmatpush1.msra.mxu0 0.0
        %657 = vmatprep.subr.mxu0 0.0
        %658 = vmatpush1.msra.mxu0 0.0
        %659 = vmatprep.subr.mxu0 0.0
        %660 = vmatpush1.msra.mxu0 0.0
        %661 = vmatprep.subr.mxu0 0.0
        %662 = vmatpush1.msra.mxu0 0.0
        %663 = vmatprep.subr.mxu0 0.0
        %664 = vmatpush1.msra.mxu0 0.0
        %665 = vmatprep.subr.mxu0 0.0
        %666 = vmatpush1.msra.mxu0 0.0
        %667 = vmatprep.subr.mxu0 0.0
        %668 = vmatpush1.msra.mxu0 0.0
        %669 = vmatprep.subr.mxu0 0.0
        %670 = vmatpush1.msra.mxu0 0.0
        %671 = vmatprep.subr.mxu0 0.0
        %672 = vmatpush1.msra.mxu0 0.0
        %673 = vmatprep.subr.mxu0 0.0
        %674 = vmatpush1.msra.mxu0 0.0
        %675 = vmatprep.subr.mxu0 0.0
        %676 = vmatpush1.msra.mxu0 0.0
        %677 = vmatprep.subr.mxu0 0.0
        %678 = vmatpush1.msra.mxu0 0.0
        %679 = vmatprep.subr.mxu0 0.0
        %680 = vmatpush1.msra.mxu0 0.0
        %681 = vmatprep.subr.mxu0 0.0
        %682 = vmatpush1.msra.mxu0 0.0
        %683 = vmatprep.subr.mxu0 0.0
        %684 = vmatpush1.msra.mxu0 0.0
        %685 = vmatprep.subr.mxu0 0.0
        %686 = vmatpush1.msra.mxu0 0.0
        %687 = vmatprep.subr.mxu0 0.0
        %688 = vmatpush1.msra.mxu0 0.0
        %689 = vmatprep.subr.mxu0 0.0
        %690 = vmatpush1.msra.mxu0 0.0
        %691 = vmatprep.mubr.f32.mxu0 0.0
        %692 = vmatmul.mubr.f32.gmra.mrb[0].mxu0 %v625
        %v693 = vpop.f32.mrb[0].mxu0
        %v694 = vadd.f32 0.0, %v693
        %v695 = vpop.f32.mrb[0].mxu0
        %696 = vdwg.mxu0
        %v697 = vpack.c.bf16 %v694, %v694
        %vm698 = vcmask 64512
        %v700 = vsel %vm698, %v481, 0
        %vm702 = vcmask 1043456
        %v704 = vsel %vm702, %v618, 0
        %706 = vmatprep.subr.bf16.mxu0 0
        %707 = vmatpush1.bf16.msra.mxu0 %v704
        %708 = vmatprep.subr.bf16.mxu0 0
        %709 = vmatpush1.bf16.msra.mxu0 0
        %710 = vmatprep.subr.bf16.mxu0 0
        %711 = vmatpush1.bf16.msra.mxu0 0
        %712 = vmatprep.subr.bf16.mxu0 0
        %713 = vmatpush1.bf16.msra.mxu0 0
        %714 = vmatprep.subr.bf16.mxu0 0
        %715 = vmatpush1.bf16.msra.mxu0 0
        %716 = vmatprep.subr.bf16.mxu0 0
        %717 = vmatpush1.bf16.msra.mxu0 0
        %718 = vmatprep.subr.bf16.mxu0 0
        %719 = vmatpush1.bf16.msra.mxu0 0
        %720 = vmatprep.subr.bf16.mxu0 0
        %721 = vmatpush1.bf16.msra.mxu0 0
        %722 = vmatprep.subr.bf16.mxu0 0
        %723 = vmatpush1.bf16.msra.mxu0 0
        %724 = vmatprep.subr.bf16.mxu0 0
        %725 = vmatpush1.bf16.msra.mxu0 0
        %726 = vmatprep.subr.bf16.mxu0 0
        %727 = vmatpush1.bf16.msra.mxu0 0
        %728 = vmatprep.subr.bf16.mxu0 0
        %729 = vmatpush1.bf16.msra.mxu0 0
        %730 = vmatprep.subr.bf16.mxu0 0
        %731 = vmatpush1.bf16.msra.mxu0 0
        %732 = vmatprep.subr.bf16.mxu0 0
        %733 = vmatpush1.bf16.msra.mxu0 0
        %734 = vmatprep.subr.bf16.mxu0 0
        %735 = vmatpush1.bf16.msra.mxu0 0
        %736 = vmatprep.subr.bf16.mxu0 0
        %737 = vmatpush1.bf16.msra.mxu0 0
        %738 = vmatprep.mubr.bf16.mxu0 0
        %739 = vmatmul.mubr.bf16.gmra.mrb[0].mxu0 %v700
        %v740 = vpop.f32.mrb[0].mxu0
        %v741 = vadd.f32 0.0, %v740
        %v742 = vpop.f32.mrb[0].mxu0
        %v743 = vpop.f32.mrb[0].mxu0
        %v744 = vpop.f32.mrb[0].mxu0
        %745 = vdwg.mxu0
        %v746 = vsel %vm698, %v741, -inf
        %747 = vmax.xlane.f32.xlu0 %v746
        %v748 = vpop.xlane.xlu0 %747
        %v749 = vsub.f32 %v741, %v748
        %v750 = vmul.f32 %v749, 1.442695
        %v751 = vpow.pop %v750
        %v752 = vsel %vm698, %v751, 0.0
        %753 = vadd.xlane.f32.xlu0 %v752
        %v754 = vpop.xlane.xlu0 %753
        %v755 = vrcp.pop %v754
        %v756 = vmul.f32 %v751, %v755
        %v757 = vpack.c.bf16 %v756, %v756
        %v759 = vsel %vm698, %v757, 0
        %v762 = vsel %vm702, %v697, 0
        %764 = vmatprep.subr.bf16.mxu0 0
        %765 = vmatpush1.bf16.msra.mxu0 %v762
        %766 = vmatprep.subr.bf16.mxu0 0
        %767 = vmatpush1.bf16.msra.mxu0 0
        %768 = vmatprep.subr.bf16.mxu0 0
        %769 = vmatpush1.bf16.msra.mxu0 0
        %770 = vmatprep.subr.bf16.mxu0 0
        %771 = vmatpush1.bf16.msra.mxu0 0
        %772 = vmatprep.subr.bf16.mxu0 0
        %773 = vmatpush1.bf16.msra.mxu0 0
        %774 = vmatprep.subr.bf16.mxu0 0
        %775 = vmatpush1.bf16.msra.mxu0 0
        %776 = vmatprep.subr.bf16.mxu0 0
        %777 = vmatpush1.bf16.msra.mxu0 0
        %778 = vmatprep.subr.bf16.mxu0 0
        %779 = vmatpush1.bf16.msra.mxu0 0
        %780 = vmatprep.subr.bf16.mxu0 0
        %781 = vmatpush1.bf16.msra.mxu0 0
        %782 = vmatprep.subr.bf16.mxu0 0
        %783 = vmatpush1.bf16.msra.mxu0 0
        %784 = vmatprep.subr.bf16.mxu0 0
        %785 = vmatpush1.bf16.msra.mxu0 0
        %786 = vmatprep.subr.bf16.mxu0 0
        %787 = vmatpush1.bf16.msra.mxu0 0
        %788 = vmatprep.subr.bf16.mxu0 0
        %789 = vmatpush1.bf16.msra.mxu0 0
        %790 = vmatprep.subr.bf16.mxu0 0
        %791 = vmatpush1.bf16.msra.mxu0 0
        %792 = vmatprep.subr.bf16.mxu0 0
        %793 = vmatpush1.bf16.msra.mxu0 0
        %794 = vmatprep.subr.bf16.mxu0 0
        %795 = vmatpush1.bf16.msra.mxu0 0
        %796 = vmatprep.mubr.bf16.mxu0 0
        %797 = vmatmul.mubr.bf16.gmra.mrb[0].mxu0 %v759
        %v798 = vpop.f32.mrb[0].mxu0
        %v799 = vadd.f32 0.0, %v798
        %v800 = vpop.f32.mrb[0].mxu0
        %v801 = vpop.f32.mrb[0].mxu0
        %v802 = vpop.f32.mrb[0].mxu0
        %803 = vdwg.mxu0
        %804 = vst.msk [vmem:[%s398] sm:$0xff] %vm698, %v799
        %806 = vrot.lane.b32.xlu0 %v481, 120
        %v807 = vpop.permute.xlu0 %806
        %v809 = vrot.slane %v618, 4
        %v811 = vsel %vm698, %v807, 0
        %v814 = vsel %vm702, %v809, 0
        %816 = vmatprep.subr.bf16.mxu0 0
        %817 = vmatpush1.bf16.msra.mxu0 %v814
        %818 = vmatprep.subr.bf16.mxu0 0
        %819 = vmatpush1.bf16.msra.mxu0 0
        %820 = vmatprep.subr.bf16.mxu0 0
        %821 = vmatpush1.bf16.msra.mxu0 0
        %822 = vmatprep.subr.bf16.mxu0 0
        %823 = vmatpush1.bf16.msra.mxu0 0
        %824 = vmatprep.subr.bf16.mxu0 0
        %825 = vmatpush1.bf16.msra.mxu0 0
        %826 = vmatprep.subr.bf16.mxu0 0
        %827 = vmatpush1.bf16.msra.mxu0 0
        %828 = vmatprep.subr.bf16.mxu0 0
        %829 = vmatpush1.bf16.msra.mxu0 0
        %830 = vmatprep.subr.bf16.mxu0 0
        %831 = vmatpush1.bf16.msra.mxu0 0
        %832 = vmatprep.subr.bf16.mxu0 0
        %833 = vmatpush1.bf16.msra.mxu0 0
        %834 = vmatprep.subr.bf16.mxu0 0
        %835 = vmatpush1.bf16.msra.mxu0 0
        %836 = vmatprep.subr.bf16.mxu0 0
        %837 = vmatpush1.bf16.msra.mxu0 0
        %838 = vmatprep.subr.bf16.mxu0 0
        %839 = vmatpush1.bf16.msra.mxu0 0
        %840 = vmatprep.subr.bf16.mxu0 0
        %841 = vmatpush1.bf16.msra.mxu0 0
        %842 = vmatprep.subr.bf16.mxu0 0
        %843 = vmatpush1.bf16.msra.mxu0 0
        %844 = vmatprep.subr.bf16.mxu0 0
        %845 = vmatpush1.bf16.msra.mxu0 0
        %846 = vmatprep.subr.bf16.mxu0 0
        %847 = vmatpush1.bf16.msra.mxu0 0
        %848 = vmatprep.mubr.bf16.mxu0 0
        %849 = vmatmul.mubr.bf16.gmra.mrb[0].mxu0 %v811
        %v850 = vpop.f32.mrb[0].mxu0
        %v851 = vadd.f32 0.0, %v850
        %v852 = vpop.f32.mrb[0].mxu0
        %v853 = vpop.f32.mrb[0].mxu0
        %v854 = vpop.f32.mrb[0].mxu0
        %855 = vdwg.mxu0
        %v856 = vsel %vm698, %v851, -inf
        %857 = vmax.xlane.f32.xlu0 %v856
        %v858 = vpop.xlane.xlu0 %857
        %v859 = vsub.f32 %v851, %v858
        %v860 = vmul.f32 %v859, 1.442695
        %v861 = vpow.pop %v860
        %v862 = vsel %vm698, %v861, 0.0
        %863 = vadd.xlane.f32.xlu0 %v862
        %v864 = vpop.xlane.xlu0 %863
        %v865 = vrcp.pop %v864
        %v866 = vmul.f32 %v861, %v865
        %v867 = vpack.c.bf16 %v866, %v866
        %869 = vrot.lane.b32.xlu0 %v697, 120
        %v870 = vpop.permute.xlu0 %869
        %v872 = vsel %vm698, %v867, 0
        %v875 = vsel %vm702, %v870, 0
        %877 = vmatprep.subr.bf16.mxu0 0
        %878 = vmatpush1.bf16.msra.mxu0 %v875
        %879 = vmatprep.subr.bf16.mxu0 0
        %880 = vmatpush1.bf16.msra.mxu0 0
        %881 = vmatprep.subr.bf16.mxu0 0
        %882 = vmatpush1.bf16.msra.mxu0 0
        %883 = vmatprep.subr.bf16.mxu0 0
        %884 = vmatpush1.bf16.msra.mxu0 0
        %885 = vmatprep.subr.bf16.mxu0 0
        %886 = vmatpush1.bf16.msra.mxu0 0
        %887 = vmatprep.subr.bf16.mxu0 0
        %888 = vmatpush1.bf16.msra.mxu0 0
        %889 = vmatprep.subr.bf16.mxu0 0
        %890 = vmatpush1.bf16.msra.mxu0 0
        %891 = vmatprep.subr.bf16.mxu0 0
        %892 = vmatpush1.bf16.msra.mxu0 0
        %893 = vmatprep.subr.bf16.mxu0 0
        %894 = vmatpush1.bf16.msra.mxu0 0
        %895 = vmatprep.subr.bf16.mxu0 0
        %896 = vmatpush1.bf16.msra.mxu0 0
        %897 = vmatprep.subr.bf16.mxu0 0
        %898 = vmatpush1.bf16.msra.mxu0 0
        %899 = vmatprep.subr.bf16.mxu0 0
        %900 = vmatpush1.bf16.msra.mxu0 0
        %901 = vmatprep.subr.bf16.mxu0 0
        %902 = vmatpush1.bf16.msra.mxu0 0
        %903 = vmatprep.subr.bf16.mxu0 0
        %904 = vmatpush1.bf16.msra.mxu0 0
        %905 = vmatprep.subr.bf16.mxu0 0
        %906 = vmatpush1.bf16.msra.mxu0 0
        %907 = vmatprep.subr.bf16.mxu0 0
        %908 = vmatpush1.bf16.msra.mxu0 0
        %909 = vmatprep.mubr.bf16.mxu0 0
        %910 = vmatmul.mubr.bf16.gmra.mrb[0].mxu0 %v872
        %v911 = vpop.f32.mrb[0].mxu0
        %v912 = vadd.f32 0.0, %v911
        %v913 = vpop.f32.mrb[0].mxu0
        %v914 = vpop.f32.mrb[0].mxu0
        %v915 = vpop.f32.mrb[0].mxu0
        %916 = vdwg.mxu0
        %918 = vrot.lane.b32.xlu0 %v912, 8
        %v919 = vpop.permute.xlu0 %918
        %vm921 = vcmask 130112
        %922 = vst.msk [vmem:[%s398] sm:$0xff] %vm921, %v919
        %923 = vrot.lane.b32.xlu0 %v481, 112
        %v924 = vpop.permute.xlu0 %923
        %v926 = vsel %vm698, %v924, 0
        %v929 = vsel %vm702, %v619, 0
        %931 = vmatprep.subr.bf16.mxu0 0
        %932 = vmatpush1.bf16.msra.mxu0 %v929
        %933 = vmatprep.subr.bf16.mxu0 0
        %934 = vmatpush1.bf16.msra.mxu0 0
        %935 = vmatprep.subr.bf16.mxu0 0
        %936 = vmatpush1.bf16.msra.mxu0 0
        %937 = vmatprep.subr.bf16.mxu0 0
        %938 = vmatpush1.bf16.msra.mxu0 0
        %939 = vmatprep.subr.bf16.mxu0 0
        %940 = vmatpush1.bf16.msra.mxu0 0
        %941 = vmatprep.subr.bf16.mxu0 0
        %942 = vmatpush1.bf16.msra.mxu0 0
        %943 = vmatprep.subr.bf16.mxu0 0
        %944 = vmatpush1.bf16.msra.mxu0 0
        %945 = vmatprep.subr.bf16.mxu0 0
        %946 = vmatpush1.bf16.msra.mxu0 0
        %947 = vmatprep.subr.bf16.mxu0 0
        %948 = vmatpush1.bf16.msra.mxu0 0
        %949 = vmatprep.subr.bf16.mxu0 0
        %950 = vmatpush1.bf16.msra.mxu0 0
        %951 = vmatprep.subr.bf16.mxu0 0
        %952 = vmatpush1.bf16.msra.mxu0 0
        %953 = vmatprep.subr.bf16.mxu0 0
        %954 = vmatpush1.bf16.msra.mxu0 0
        %955 = vmatprep.subr.bf16.mxu0 0
        %956 = vmatpush1.bf16.msra.mxu0 0
        %957 = vmatprep.subr.bf16.mxu0 0
        %958 = vmatpush1.bf16.msra.mxu0 0
        %959 = vmatprep.subr.bf16.mxu0 0
        %960 = vmatpush1.bf16.msra.mxu0 0
        %961 = vmatprep.subr.bf16.mxu0 0
        %962 = vmatpush1.bf16.msra.mxu0 0
        %963 = vmatprep.mubr.bf16.mxu0 0
        %964 = vmatmul.mubr.bf16.gmra.mrb[0].mxu0 %v926
        %v965 = vpop.f32.mrb[0].mxu0
        %v966 = vadd.f32 0.0, %v965
        %v967 = vpop.f32.mrb[0].mxu0
        %v968 = vpop.f32.mrb[0].mxu0
        %v969 = vpop.f32.mrb[0].mxu0
        %970 = vdwg.mxu0
        %v971 = vsel %vm698, %v966, -inf
        %972 = vmax.xlane.f32.xlu0 %v971
        %v973 = vpop.xlane.xlu0 %972
        %v974 = vsub.f32 %v966, %v973
        %v975 = vmul.f32 %v974, 1.442695
        %v976 = vpow.pop %v975
        %v977 = vsel %vm698, %v976, 0.0
        %978 = vadd.xlane.f32.xlu0 %v977
        %v979 = vpop.xlane.xlu0 %978
        %v980 = vrcp.pop %v979
        %v981 = vmul.f32 %v976, %v980
        %v982 = vpack.c.bf16 %v981, %v981
        %983 = vrot.lane.b32.xlu0 %v697, 112
        %v984 = vpop.permute.xlu0 %983
        %v986 = vsel %vm698, %v982, 0
        %v989 = vsel %vm702, %v984, 0
        %991 = vmatprep.subr.bf16.mxu0 0
        %992 = vmatpush1.bf16.msra.mxu0 %v989
        %993 = vmatprep.subr.bf16.mxu0 0
        %994 = vmatpush1.bf16.msra.mxu0 0
        %995 = vmatprep.subr.bf16.mxu0 0
        %996 = vmatpush1.bf16.msra.mxu0 0
        %997 = vmatprep.subr.bf16.mxu0 0
        %998 = vmatpush1.bf16.msra.mxu0 0
        %999 = vmatprep.subr.bf16.mxu0 0
        %1000 = vmatpush1.bf16.msra.mxu0 0
        %1001 = vmatprep.subr.bf16.mxu0 0
        %1002 = vmatpush1.bf16.msra.mxu0 0
        %1003 = vmatprep.subr.bf16.mxu0 0
        %1004 = vmatpush1.bf16.msra.mxu0 0
        %1005 = vmatprep.subr.bf16.mxu0 0
        %1006 = vmatpush1.bf16.msra.mxu0 0
        %1007 = vmatprep.subr.bf16.mxu0 0
        %1008 = vmatpush1.bf16.msra.mxu0 0
        %1009 = vmatprep.subr.bf16.mxu0 0
        %1010 = vmatpush1.bf16.msra.mxu0 0
        %1011 = vmatprep.subr.bf16.mxu0 0
        %1012 = vmatpush1.bf16.msra.mxu0 0
        %1013 = vmatprep.subr.bf16.mxu0 0
        %1014 = vmatpush1.bf16.msra.mxu0 0
        %1015 = vmatprep.subr.bf16.mxu0 0
        %1016 = vmatpush1.bf16.msra.mxu0 0
        %1017 = vmatprep.subr.bf16.mxu0 0
        %1018 = vmatpush1.bf16.msra.mxu0 0
        %1019 = vmatprep.subr.bf16.mxu0 0
        %1020 = vmatpush1.bf16.msra.mxu0 0
        %1021 = vmatprep.subr.bf16.mxu0 0
        %1022 = vmatpush1.bf16.msra.mxu0 0
        %1023 = vmatprep.mubr.bf16.mxu0 0
        %1024 = vmatmul.mubr.bf16.gmra.mrb[0].mxu0 %v986
        %v1025 = vpop.f32.mrb[0].mxu0
        %v1026 = vadd.f32 0.0, %v1025
        %v1027 = vpop.f32.mrb[0].mxu0
        %v1028 = vpop.f32.mrb[0].mxu0
        %v1029 = vpop.f32.mrb[0].mxu0
        %1030 = vdwg.mxu0
        %1032 = vrot.lane.b32.xlu0 %v1026, 16
        %v1033 = vpop.permute.xlu0 %1032
        %vm1035 = vcmask 195712
        %1036 = vst.msk [vmem:[%s398] sm:$0xff] %vm1035, %v1033
        %1037 = vrot.lane.b32.xlu0 %v481, 104
        %v1038 = vpop.permute.xlu0 %1037
        %v1040 = vrot.slane %v619, 4
        %v1042 = vsel %vm698, %v1038, 0
        %v1045 = vsel %vm702, %v1040, 0
        %1047 = vmatprep.subr.bf16.mxu0 0
        %1048 = vmatpush1.bf16.msra.mxu0 %v1045
        %1049 = vmatprep.subr.bf16.mxu0 0
        %1050 = vmatpush1.bf16.msra.mxu0 0
        %1051 = vmatprep.subr.bf16.mxu0 0
        %1052 = vmatpush1.bf16.msra.mxu0 0
        %1053 = vmatprep.subr.bf16.mxu0 0
        %1054 = vmatpush1.bf16.msra.mxu0 0
        %1055 = vmatprep.subr.bf16.mxu0 0
        %1056 = vmatpush1.bf16.msra.mxu0 0
        %1057 = vmatprep.subr.bf16.mxu0 0
        %1058 = vmatpush1.bf16.msra.mxu0 0
        %1059 = vmatprep.subr.bf16.mxu0 0
        %1060 = vmatpush1.bf16.msra.mxu0 0
        %1061 = vmatprep.subr.bf16.mxu0 0
        %1062 = vmatpush1.bf16.msra.mxu0 0
        %1063 = vmatprep.subr.bf16.mxu0 0
        %1064 = vmatpush1.bf16.msra.mxu0 0
        %1065 = vmatprep.subr.bf16.mxu0 0
        %1066 = vmatpush1.bf16.msra.mxu0 0
        %1067 = vmatprep.subr.bf16.mxu0 0
        %1068 = vmatpush1.bf16.msra.mxu0 0
        %1069 = vmatprep.subr.bf16.mxu0 0
        %1070 = vmatpush1.bf16.msra.mxu0 0
        %1071 = vmatprep.subr.bf16.mxu0 0
        %1072 = vmatpush1.bf16.msra.mxu0 0
        %1073 = vmatprep.subr.bf16.mxu0 0
        %1074 = vmatpush1.bf16.msra.mxu0 0
        %1075 = vmatprep.subr.bf16.mxu0 0
        %1076 = vmatpush1.bf16.msra.mxu0 0
        %1077 = vmatprep.subr.bf16.mxu0 0
        %1078 = vmatpush1.bf16.msra.mxu0 0
        %1079 = vmatprep.mubr.bf16.mxu0 0
        %1080 = vmatmul.mubr.bf16.gmra.mrb[0].mxu0 %v1042
        %v1081 = vpop.f32.mrb[0].mxu0
        %v1082 = vadd.f32 0.0, %v1081
        %v1083 = vpop.f32.mrb[0].mxu0
        %v1084 = vpop.f32.mrb[0].mxu0
        %v1085 = vpop.f32.mrb[0].mxu0
        %1086 = vdwg.mxu0
        %v1087 = vsel %vm698, %v1082, -inf
        %1088 = vmax.xlane.f32.xlu0 %v1087
        %v1089 = vpop.xlane.xlu0 %1088
        %v1090 = vsub.f32 %v1082, %v1089
        %v1091 = vmul.f32 %v1090, 1.442695
        %v1092 = vpow.pop %v1091
        %v1093 = vsel %vm698, %v1092, 0.0
        %1094 = vadd.xlane.f32.xlu0 %v1093
        %v1095 = vpop.xlane.xlu0 %1094
        %v1096 = vrcp.pop %v1095
        %v1097 = vmul.f32 %v1092, %v1096
        %v1098 = vpack.c.bf16 %v1097, %v1097
        %1099 = vrot.lane.b32.xlu0 %v697, 104
        %v1100 = vpop.permute.xlu0 %1099
        %v1102 = vsel %vm698, %v1098, 0
        %v1105 = vsel %vm702, %v1100, 0
        %1107 = vmatprep.subr.bf16.mxu0 0
        %1108 = vmatpush1.bf16.msra.mxu0 %v1105
        %1109 = vmatprep.subr.bf16.mxu0 0
        %1110 = vmatpush1.bf16.msra.mxu0 0
        %1111 = vmatprep.subr.bf16.mxu0 0
        %1112 = vmatpush1.bf16.msra.mxu0 0
        %1113 = vmatprep.subr.bf16.mxu0 0
        %1114 = vmatpush1.bf16.msra.mxu0 0
        %1115 = vmatprep.subr.bf16.mxu0 0
        %1116 = vmatpush1.bf16.msra.mxu0 0
        %1117 = vmatprep.subr.bf16.mxu0 0
        %1118 = vmatpush1.bf16.msra.mxu0 0
        %1119 = vmatprep.subr.bf16.mxu0 0
        %1120 = vmatpush1.bf16.msra.mxu0 0
        %1121 = vmatprep.subr.bf16.mxu0 0
        %1122 = vmatpush1.bf16.msra.mxu0 0
        %1123 = vmatprep.subr.bf16.mxu0 0
        %1124 = vmatpush1.bf16.msra.mxu0 0
        %1125 = vmatprep.subr.bf16.mxu0 0
        %1126 = vmatpush1.bf16.msra.mxu0 0
        %1127 = vmatprep.subr.bf16.mxu0 0
        %1128 = vmatpush1.bf16.msra.mxu0 0
        %1129 = vmatprep.subr.bf16.mxu0 0
        %1130 = vmatpush1.bf16.msra.mxu0 0
        %1131 = vmatprep.subr.bf16.mxu0 0
        %1132 = vmatpush1.bf16.msra.mxu0 0
        %1133 = vmatprep.subr.bf16.mxu0 0
        %1134 = vmatpush1.bf16.msra.mxu0 0
        %1135 = vmatprep.subr.bf16.mxu0 0
        %1136 = vmatpush1.bf16.msra.mxu0 0
        %1137 = vmatprep.subr.bf16.mxu0 0
        %1138 = vmatpush1.bf16.msra.mxu0 0
        %1139 = vmatprep.mubr.bf16.mxu0 0
        %1140 = vmatmul.mubr.bf16.gmra.mrb[0].mxu0 %v1102
        %v1141 = vpop.f32.mrb[0].mxu0
        %v1142 = vadd.f32 0.0, %v1141
        %v1143 = vpop.f32.mrb[0].mxu0
        %v1144 = vpop.f32.mrb[0].mxu0
        %v1145 = vpop.f32.mrb[0].mxu0
        %1146 = vdwg.mxu0
        %1148 = vrot.lane.b32.xlu0 %v1142, 24
        %v1149 = vpop.permute.xlu0 %1148
        %vm1151 = vcmask 261312
        %1152 = vst.msk [vmem:[%s398] sm:$0xff] %vm1151, %v1149
        %s1153 = sand.u32 %s193, 1
        %s1154 = scalar_lea.sflag [#allocation4], %s1153
        %s1155 = sand.u32 %s193, 1
        %s1156 = smul.addr %s1155, 8
        %s1157 = scalar_lea.vmem [#allocation13], %s1156
        // Predicated region
        $region69: #{tpu_custom_call.1} parent=43 // pred_check
          %p1158 = pneg %p203
        $region70: #{tpu_custom_call.1} parent=43 // pred_check_branch
          %1160 = sbr.rel (%p1158) target = $region72
        $region71: #{tpu_custom_call.1} parent=43 // pred_region
          %s1162 = ssub.s32 128, 128
          %1163 = vsyncadd %s1154, %s1162
          %s1164 = sadd.s32 %s33, %s32
          %s1165 = smul.addr %s1164, 128
          %s1166 = scalar_lea.hbm %s6, %s1165
          %s1168 = sshll.u32 %s1157, 4
          %s1169 = int_to_ptr.vmem [resolvable:$true] %s1168
          %1171 = dma.vmem_to_hbm [thread:$0]  %s1169, 128, %s1166, %s1154
        $region72: #{tpu_custom_call.1} parent=43 // pred_fallthru
          _
      $region44: #{tpu_custom_call.1} parent=5 // pred_fallthru
        _
      %p1172 = scmp.le.s32.totalorder 2, %s23
      // Predicated region
      $region73: #{tpu_custom_call.1} parent=5 // pred_check
        %p1173 = pneg %p1172
      $region74: #{tpu_custom_call.1} parent=5 // pred_check_branch
        %1175 = sbr.rel (%p1173) target = $region76
      $region75: #{tpu_custom_call.1} parent=5 // pred_region
        %s1176 = ssub.s32 %s23, 2
        // Predicated region
        $region77: #{tpu_custom_call.1} parent=75 // pred_check
          %p1177 = pneg %p209
        $region78: #{tpu_custom_call.1} parent=75 // pred_check_branch
          %1179 = sbr.rel (%p1177) target = $region80
        $region79: #{tpu_custom_call.1} parent=75 // pred_region
          %s1180 = sand.u32 %s194, 1
          %s1181 = scalar_lea.sflag [#allocation4], %s1180
          %s1182 = sand.u32 %s194, 1
          %s1183 = smul.addr %s1182, 8
          %s1184 = scalar_lea.vmem [#allocation13], %s1183
          %1185 = dma.done %s1181, 128
        $region80: #{tpu_custom_call.1} parent=75 // pred_fallthru
          _
      $region76: #{tpu_custom_call.1} parent=5 // pred_fallthru
        _
    $region6: #{tpu_custom_call.1} parent=1 // loop_footer
      %s27 = sadd.s32 1, %s23
    $region7: #{tpu_custom_call.1} parent=1 // loop_footer_branch
      %22 = sbr.rel target = $region3
    $region8: #{tpu_custom_call.1} parent=1 // loop_exit
      _
    %1186 = vsyncpa [#allocation3], 1
    %s1187 = scalar_lea.sflag [#allocation3], 1
    %1188 = vsyncpa %s1187, 1
    %1189 = vsyncpa [#allocation6], 1
    %s1190 = scalar_lea.sflag [#allocation6], 1
    %1191 = vsyncpa %s1190, 1
    %1192 = vsyncpa [#allocation9], 1
    %1193 = vsyncpa [#allocation12], 1
    %1194 = vsyncpa [#allocation4], 1
    %s1195 = scalar_lea.sflag [#allocation4], 1
    %1196 = vsyncpa %s1195, 1

</llo_original>
